<compile_context>
chip_gen: v7x
topology: tpu7x:2x2x1
jax: 0.10.0
libtpu: 0.0.40
codegen_flags: <defaults>
</compile_context>

<pallas_src>
import functools

import jax
import jax.numpy as jnp
from jax.experimental import pallas as pl
from jax.experimental.pallas import tpu as pltpu

LN_EPS = 1e-5   # torch.nn.LayerNorm default
_LANE = 128


def _round_up(v, m):
    return ((v + m - 1) // m) * m


# ---------------------------------------------------------------------------
# Kernel
# ---------------------------------------------------------------------------
def _make_fused_mlp_kernel(num_layers, use_feature_normalization, true_dims,
                           matmul_dtype):
    """Kernel refs: (x, [w_0, vec_0, ..., w_{L-1}, vec_{L-1}], out).

    vec_i is (3, d_pad_i) f32 = [effective bias; ln_gamma; ln_beta] (gamma/beta
    rows are only read for the final layer; earlier affines are folded into the
    next layer's weights on the wrapper side).
    """

    def kernel(*refs):
        x = refs[0][...].astype(jnp.float32)
        out_ref = refs[-1]

        if use_feature_normalization:
            # Two-pass variance: raw observations may have large mean/scale.
            mean = jnp.mean(x, axis=-1, keepdims=True)
            xc = x - mean
            var = jnp.mean(xc * xc, axis=-1, keepdims=True)
            x = xc * jax.lax.rsqrt(var + LN_EPS)
            # (feature-norm gamma/beta are folded into layer 0's W/b)

        for li in range(num_layers):
            w_ref = refs[1 + 2 * li]
            vec_ref = refs[2 + 2 * li]
            inv_d = 1.0 / float(true_dims[li])

            # MXU matmul: operands in matmul_dtype (weights pre-cast in the
            # wrapper), accumulation in f32.
            h = jnp.dot(x.astype(matmul_dtype), w_ref[...],
                        preferred_element_type=jnp.float32)
            h = h + vec_ref[0:1, :]            # effective bias (f32)
            h = jnp.maximum(h, 0.0)            # ReLU (HARL default)

            # Pad lanes of h are exactly 0 (zero W columns / zero bias), so a
            # plain lane sum divided by the TRUE width gives masked LN stats.
            s1 = jnp.sum(h, axis=-1, keepdims=True)
            s2 = jnp.sum(h * h, axis=-1, keepdims=True)
            mean = s1 * inv_d
            var = jnp.maximum(s2 * inv_d - mean * mean, 0.0)
            x = (h - mean) * jax.lax.rsqrt(var + LN_EPS)

            if li == num_layers - 1:
                # Only the final LN applies its own affine; pad gamma/beta are
                # 0, so pad lanes of the output slab are exactly 0.
                x = x * vec_ref[1:2, :] + vec_ref[2:3, :]

        out_ref[...] = x.astype(out_ref.dtype)

    return kernel


# ---------------------------------------------------------------------------
# BlockSpec helpers
# ---------------------------------------------------------------------------
def _const_spec(shape):
    """Spec for a grid-invariant operand: resident in VMEM, single buffer."""
    idx_map = lambda i: (0, 0)
    try:
        return pl.BlockSpec(shape, idx_map, pipeline_mode=pl.Buffered(1))
    except Exception:
        # pipeline_mode / Buffered unavailable -> default (double) buffering.
        return pl.BlockSpec(shape, idx_map)


def _vmem_cap_bytes():
    """Generation-aware VMEM ceiling (leave headroom for compiler scratch)."""
    try:
        return int(pltpu.get_tpu_info().vmem_capacity_bytes * 3 // 4)
    except Exception:
        return 48 << 20   # v7x-safe (64 MiB physical); fine on v5e/v6e too.


# ---------------------------------------------------------------------------
# Wrapper
# ---------------------------------------------------------------------------
@functools.partial(
    jax.jit,
    static_argnames=("use_feature_normalization", "tb", "matmul_dtype"))
def mlp_base_forward(params, x, *, use_feature_normalization=True, tb=256,
                     matmul_dtype=jnp.bfloat16):
    B, D_in = x.shape
    layers = params["layers"]
    num_layers = len(layers)
    assert num_layers >= 1

    # ---- Wrapper-side prep: fold LN affines into the next Linear, pad the
    # ---- hidden dims to multiples of 128, cast weights to matmul_dtype once.
    eff_w, eff_vec = [], []
    true_dims, pad_dims = [], []
    prev_gamma = prev_beta = None
    prev_pad = D_in
    if use_feature_normalization:
        fn = params["feature_norm"]
        prev_gamma = fn["gamma"].astype(jnp.float32)
        prev_beta = fn["beta"].astype(jnp.float32)

    for li, layer in enumerate(layers):
        w0 = layer["w"].astype(jnp.float32)            # (d_in, d_out)
        b0 = layer["b"].astype(jnp.float32)
        d_in, d_out = w0.shape
        if prev_gamma is not None:                     # fold previous LN affine
            w = prev_gamma[:, None] * w0
            b = prev_beta @ w0 + b0
        else:
            w, b = w0, b0
        d_pad = _round_up(d_out, _LANE)
        w = jnp.pad(w, ((0, prev_pad - d_in), (0, d_pad - d_out)))
        b = jnp.pad(b, (0, d_pad - d_out))
        gamma = jnp.pad(layer["ln_gamma"].astype(jnp.float32), (0, d_pad - d_out))
        beta = jnp.pad(layer["ln_beta"].astype(jnp.float32), (0, d_pad - d_out))

        eff_w.append(w.astype(matmul_dtype))
        eff_vec.append(jnp.stack([b, gamma, beta], axis=0))   # (3, d_pad) f32
        true_dims.append(d_out)
        pad_dims.append(d_pad)

        if li == num_layers - 1:
            prev_gamma = prev_beta = None
        else:
            prev_gamma = layer["ln_gamma"].astype(jnp.float32)
            prev_beta = layer["ln_beta"].astype(jnp.float32)
        prev_pad = d_pad

    d_out_true = true_dims[-1]
    d_out_pad = pad_dims[-1]
    in_pads = [D_in] + pad_dims[:-1]

    # ---- Batch tile: multiple of 8, capped near ceil(B/2) so the grid has
    # ---- >= 2 steps whenever possible (v7x megacore), default 256 (vregs).
    if B <= 8:
        tb_eff = B
    else:
        half = _round_up(pl.cdiv(B, 2), 8)
        tb_eff = max(8, min((tb // 8) * 8, half))
        if tb_eff >= B:
            tb_eff = B
    grid = (pl.cdiv(B, tb_eff),)

    # ---- Specs / args.  x and out are tiled over the batch; everything else
    # ---- is grid-invariant and stays resident in VMEM (single-buffered).
    args = [x]
    in_specs = [pl.BlockSpec((tb_eff, D_in), lambda i: (i, 0))]
    for li in range(num_layers):
        args += [eff_w[li], eff_vec[li]]
        in_specs += [_const_spec(eff_w[li].shape), _const_spec(eff_vec[li].shape)]
    out_specs = pl.BlockSpec((tb_eff, d_out_pad), lambda i: (i, 0))

    # ---- Cost estimate + VMEM budget.
    mm_itemsize = jnp.dtype(matmul_dtype).itemsize
    flops = 0
    bytes_accessed = x.size * x.dtype.itemsize + B * d_out_pad * x.dtype.itemsize
    transcendentals = B * (num_layers + (1 if use_feature_normalization else 0))
    vmem_need = 2 * tb_eff * D_in * x.dtype.itemsize        # input blocks (x2)
    vmem_need += 2 * tb_eff * d_out_pad * x.dtype.itemsize  # output blocks (x2)
    for li in range(num_layers):
        flops += 2 * B * in_pads[li] * pad_dims[li] + 8 * B * pad_dims[li]
        bytes_accessed += (in_pads[li] * pad_dims[li] * mm_itemsize
                           + 3 * pad_dims[li] * 4)
        vmem_need += in_pads[li] * pad_dims[li] * mm_itemsize   # resident W
        vmem_need += 8 * pad_dims[li] * 4                        # resident vec tile
    vmem_limit = int(min(_vmem_cap_bytes(),
                         max(32 << 20, 2 * vmem_need + (4 << 20))))
    # TODO(synk): for very large hidden_sizes the v7x cap may force a smaller
    #   tb; a per-layer K-split of the weights would be needed there.

    kernel = _make_fused_mlp_kernel(num_layers, use_feature_normalization,
                                    tuple(true_dims), matmul_dtype)

    out_pad = pl.pallas_call(
        kernel,
        out_shape=jax.ShapeDtypeStruct((B, d_out_pad), x.dtype),
        grid_spec=pltpu.PrefetchScalarGridSpec(
            num_scalar_prefetch=0,
            grid=grid,
            in_specs=in_specs,
            out_specs=out_specs,
        ),
        compiler_params=pltpu.CompilerParams(
            dimension_semantics=("parallel",),
            vmem_limit_bytes=vmem_limit),
        cost_estimate=pl.CostEstimate(
            flops=int(flops),
            transcendentals=int(transcendentals),
            bytes_accessed=int(bytes_accessed)),
    )(*args)

    return out_pad[:, :d_out_true]


# ---------------------------------------------------------------------------
# MLPBase: parameter construction + pure-JAX reference (spec semantics)
# ---------------------------------------------------------------------------
def init_mlp_base_params(key, obs_dim, hidden_sizes,
                         use_feature_normalization=True):
    """Synthetic parameters matching MLPBase's shapes (gain=sqrt(2) for relu;
    LayerNorm weights/biases at torch defaults; Linear bias constant 0)."""
    params = {}
    gain = jnp.sqrt(2.0)  # nn.init.calculate_gain('relu')
    if use_feature_normalization:
        params["feature_norm"] = {
            "gamma": jnp.ones((obs_dim,), jnp.float32),
            "beta": jnp.zeros((obs_dim,), jnp.float32),
        }
    layers = []
    dims = [obs_dim] + list(hidden_sizes)
    for i in range(len(hidden_sizes)):
        key, wk = jax.random.split(key)
        d_in, d_out = dims[i], dims[i + 1]
        w = jax.random.normal(wk, (d_in, d_out), jnp.float32) * (gain / jnp.sqrt(d_in))
        layers.append({
            "w": w,
            "b": jnp.zeros((d_out,), jnp.float32),
            "ln_gamma": jnp.ones((d_out,), jnp.float32),
            "ln_beta": jnp.zeros((d_out,), jnp.float32),
        })
    params["layers"] = layers
    return params


def mlp_base_forward_ref(params, x, use_feature_normalization=True):
    """Pure-JAX reference: unfused affines, two-pass LN variance, f32 matmul."""
    def ln(v, g, b):
        m = jnp.mean(v, axis=-1, keepdims=True)
        var = jnp.mean((v - m) ** 2, axis=-1, keepdims=True)
        return (v - m) * jax.lax.rsqrt(var + LN_EPS) * g + b

    if use_feature_normalization:
        fn = params["feature_norm"]
        x = ln(x, fn["gamma"], fn["beta"])
    for layer in params["layers"]:
        h = jnp.dot(x, layer["w"], preferred_element_type=jnp.float32) + layer["b"]
        h = jnp.maximum(h, 0.0)
        x = ln(h, layer["ln_gamma"], layer["ln_beta"])
    return x


if __name__ == "__main__":
    key = jax.random.PRNGKey(0)
    batch, obs_dim = 8, 32
    hidden_sizes = [64, 64]

    key, pk, xk, gk = jax.random.split(key, 4)
    params = init_mlp_base_params(pk, obs_dim, hidden_sizes,
                                  use_feature_normalization=True)

    # Perturb LN / feature-norm affines and biases away from (1, 0) so the
    # wrapper-side affine folding is genuinely exercised by the checks.
    def _perturb(p, k):
        k, k1, k2 = jax.random.split(k, 3)
        p = dict(p)
        fn = dict(p["feature_norm"])
        fn["gamma"] = fn["gamma"] + 0.1 * jax.random.normal(k1, fn["gamma"].shape)
        fn["beta"] = fn["beta"] + 0.1 * jax.random.normal(k2, fn["beta"].shape)
        p["feature_norm"] = fn
        new_layers = []
        for layer in p["layers"]:
            k, kg, kb, kbb = jax.random.split(k, 4)
            layer = dict(layer)
            layer["ln_gamma"] = layer["ln_gamma"] + 0.1 * jax.random.normal(kg, layer["ln_gamma"].shape)
            layer["ln_beta"] = layer["ln_beta"] + 0.1 * jax.random.normal(kb, layer["ln_beta"].shape)
            layer["b"] = layer["b"] + 0.05 * jax.random.normal(kbb, layer["b"].shape)
            new_layers.append(layer)
        p["layers"] = new_layers
        return p

    params = _perturb(params, gk)
    x = jax.random.normal(xk, (batch, obs_dim), jnp.float32)
    ref = mlp_base_forward_ref(params, x)

    # 1) f32 matmul operands: strict check vs the unfused two-pass reference
    #    (validates affine folding, lane padding and masked LN stats).
    out_f32 = jax.block_until_ready(
        mlp_base_forward(params, x, matmul_dtype=jnp.float32))
    assert out_f32.shape == (batch, hidden_sizes[-1])
    assert jnp.allclose(out_f32, ref, atol=1e-4, rtol=1e-4), "f32 path mismatch"

    # 2) Default path: bf16 MXU operands, f32 accumulation + f32 LN stats.
    out_bf16 = jax.block_until_ready(mlp_base_forward(params, x))
    assert out_bf16.shape == (batch, hidden_sizes[-1])
    assert bool(jnp.all(jnp.isfinite(out_bf16)))
    assert jnp.allclose(out_bf16, ref, atol=3e-2, rtol=3e-2), "bf16 path mismatch"

    # 3) Multi-step grid with a partial last batch tile (>=2 grid steps).
    key, xk2 = jax.random.split(key)
    x2 = jax.random.normal(xk2, (200, obs_dim), jnp.float32)
    out2 = jax.block_until_ready(
        mlp_base_forward(params, x2, tb=64, matmul_dtype=jnp.float32))
    ref2 = mlp_base_forward_ref(params, x2)
    assert out2.shape == (200, hidden_sizes[-1])
    assert jnp.allclose(out2, ref2, atol=1e-4, rtol=1e-4), "tiled path mismatch"

    print("KERNEL_OK")
</pallas_src>

<mosaic_0001>
module attributes {stable_mosaic.version = 11 : i64} {
  func.func @kernel(%arg0: i32, %arg1: memref<8x32xf32, #tpu.memory_space<vmem>>, %arg2: memref<32x128xf32, #tpu.memory_space<vmem>>, %arg3: memref<3x128xf32, #tpu.memory_space<vmem>>, %arg4: memref<128x128xf32, #tpu.memory_space<vmem>>, %arg5: memref<3x128xf32, #tpu.memory_space<vmem>>, %arg6: memref<8x128xf32, #tpu.memory_space<vmem>>) attributes {dimension_semantics = [#tpu.dimension_semantics<parallel>], iteration_bounds = array<i64: 1>, scalar_prefetch = 0 : i64, scratch_operands = 0 : i64, tpu.core_type = #tpu.core_type<tc>, window_params = [{transform_indices = @transform_0, window_bounds = array<i64: 8, 32>}, {pipeline_mode = #tpu.pipeline_mode<synchronous>, transform_indices = @transform_1, window_bounds = array<i64: 32, 128>}, {pipeline_mode = #tpu.pipeline_mode<synchronous>, transform_indices = @transform_2, window_bounds = array<i64: 3, 128>}, {pipeline_mode = #tpu.pipeline_mode<synchronous>, transform_indices = @transform_3, window_bounds = array<i64: 128, 128>}, {pipeline_mode = #tpu.pipeline_mode<synchronous>, transform_indices = @transform_4, window_bounds = array<i64: 3, 128>}, {transform_indices = @transform_5, window_bounds = array<i64: 8, 128>}]} {
    %c0 = arith.constant 0 : index
    %c0_0 = arith.constant 0 : index
    %0 = vector.load %arg1[%c0, %c0_0] : memref<8x32xf32, #tpu.memory_space<vmem>>, vector<8x32xf32>
    %cst = arith.constant dense<0.000000e+00> : vector<8xf32>
    %1 = vector.multi_reduction <add>, %0, %cst [1] : vector<8x32xf32> to vector<8xf32>
    %2 = vector.shape_cast %1 : vector<8xf32> to vector<8x1xf32>
    %cst_1 = arith.constant 3.200000e+01 : f32
    %3 = vector.broadcast %cst_1 : f32 to vector<8x1xf32>
    %4 = arith.divf %2, %3 : vector<8x1xf32>
    %5 = vector.broadcast %4 : vector<8x1xf32> to vector<8x32xf32>
    %6 = arith.subf %0, %5 : vector<8x32xf32>
    %7 = arith.mulf %6, %6 : vector<8x32xf32>
    %cst_2 = arith.constant dense<0.000000e+00> : vector<8xf32>
    %8 = vector.multi_reduction <add>, %7, %cst_2 [1] : vector<8x32xf32> to vector<8xf32>
    %9 = vector.shape_cast %8 : vector<8xf32> to vector<8x1xf32>
    %cst_3 = arith.constant 3.200000e+01 : f32
    %10 = vector.broadcast %cst_3 : f32 to vector<8x1xf32>
    %11 = arith.divf %9, %10 : vector<8x1xf32>
    %cst_4 = arith.constant 9.99999974E-6 : f32
    %12 = vector.broadcast %cst_4 : f32 to vector<8x1xf32>
    %13 = arith.addf %11, %12 : vector<8x1xf32>
    %14 = math.rsqrt %13 : vector<8x1xf32>
    %15 = vector.broadcast %14 : vector<8x1xf32> to vector<8x32xf32>
    %16 = arith.mulf %6, %15 : vector<8x32xf32>
    %c0_5 = arith.constant 0 : index
    %c0_6 = arith.constant 0 : index
    %17 = vector.load %arg2[%c0_5, %c0_6] : memref<32x128xf32, #tpu.memory_space<vmem>>, vector<32x128xf32>
    %cst_7 = arith.constant dense<0.000000e+00> : vector<8x128xf32>
    %18 = tpu.matmul %16, %17, %cst_7 {dimension_numbers = #tpu.dot_dimension_numbers<[1], [0], [0], [1], [0, 0, 1, 1], [], []>} : vector<8x32xf32>, vector<32x128xf32>, vector<8x128xf32> -> vector<8x128xf32>
    %c0_8 = arith.constant 0 : index
    %c0_9 = arith.constant 0 : index
    %19 = vector.load %arg3[%c0_8, %c0_9] : memref<3x128xf32, #tpu.memory_space<vmem>>, vector<1x128xf32>
    %20 = vector.broadcast %19 : vector<1x128xf32> to vector<8x128xf32>
    %21 = arith.addf %18, %20 : vector<8x128xf32>
    %cst_10 = arith.constant 0.000000e+00 : f32
    %22 = vector.broadcast %cst_10 : f32 to vector<8x128xf32>
    %23 = arith.maximumf %21, %22 : vector<8x128xf32>
    %cst_11 = arith.constant dense<0.000000e+00> : vector<8xf32>
    %24 = vector.multi_reduction <add>, %23, %cst_11 [1] : vector<8x128xf32> to vector<8xf32>
    %25 = vector.shape_cast %24 : vector<8xf32> to vector<8x1xf32>
    %26 = arith.mulf %23, %23 : vector<8x128xf32>
    %cst_12 = arith.constant dense<0.000000e+00> : vector<8xf32>
    %27 = vector.multi_reduction <add>, %26, %cst_12 [1] : vector<8x128xf32> to vector<8xf32>
    %28 = vector.shape_cast %27 : vector<8xf32> to vector<8x1xf32>
    %cst_13 = arith.constant 1.562500e-02 : f32
    %29 = vector.broadcast %cst_13 : f32 to vector<8x1xf32>
    %30 = arith.mulf %25, %29 : vector<8x1xf32>
    %cst_14 = arith.constant 1.562500e-02 : f32
    %31 = vector.broadcast %cst_14 : f32 to vector<8x1xf32>
    %32 = arith.mulf %28, %31 : vector<8x1xf32>
    %33 = arith.mulf %30, %30 : vector<8x1xf32>
    %34 = arith.subf %32, %33 : vector<8x1xf32>
    %cst_15 = arith.constant 0.000000e+00 : f32
    %35 = vector.broadcast %cst_15 : f32 to vector<8x1xf32>
    %36 = arith.maximumf %34, %35 : vector<8x1xf32>
    %37 = vector.broadcast %30 : vector<8x1xf32> to vector<8x128xf32>
    %38 = arith.subf %23, %37 : vector<8x128xf32>
    %cst_16 = arith.constant 9.99999974E-6 : f32
    %39 = vector.broadcast %cst_16 : f32 to vector<8x1xf32>
    %40 = arith.addf %36, %39 : vector<8x1xf32>
    %41 = math.rsqrt %40 : vector<8x1xf32>
    %42 = vector.broadcast %41 : vector<8x1xf32> to vector<8x128xf32>
    %43 = arith.mulf %38, %42 : vector<8x128xf32>
    %c0_17 = arith.constant 0 : index
    %c0_18 = arith.constant 0 : index
    %44 = vector.load %arg4[%c0_17, %c0_18] : memref<128x128xf32, #tpu.memory_space<vmem>>, vector<128x128xf32>
    %cst_19 = arith.constant dense<0.000000e+00> : vector<8x128xf32>
    %45 = tpu.matmul %43, %44, %cst_19 {dimension_numbers = #tpu.dot_dimension_numbers<[1], [0], [0], [1], [0, 0, 1, 1], [], []>} : vector<8x128xf32>, vector<128x128xf32>, vector<8x128xf32> -> vector<8x128xf32>
    %c0_20 = arith.constant 0 : index
    %c0_21 = arith.constant 0 : index
    %46 = vector.load %arg5[%c0_20, %c0_21] : memref<3x128xf32, #tpu.memory_space<vmem>>, vector<1x128xf32>
    %47 = vector.broadcast %46 : vector<1x128xf32> to vector<8x128xf32>
    %48 = arith.addf %45, %47 : vector<8x128xf32>
    %cst_22 = arith.constant 0.000000e+00 : f32
    %49 = vector.broadcast %cst_22 : f32 to vector<8x128xf32>
    %50 = arith.maximumf %48, %49 : vector<8x128xf32>
    %cst_23 = arith.constant dense<0.000000e+00> : vector<8xf32>
    %51 = vector.multi_reduction <add>, %50, %cst_23 [1] : vector<8x128xf32> to vector<8xf32>
    %52 = vector.shape_cast %51 : vector<8xf32> to vector<8x1xf32>
    %53 = arith.mulf %50, %50 : vector<8x128xf32>
    %cst_24 = arith.constant dense<0.000000e+00> : vector<8xf32>
    %54 = vector.multi_reduction <add>, %53, %cst_24 [1] : vector<8x128xf32> to vector<8xf32>
    %55 = vector.shape_cast %54 : vector<8xf32> to vector<8x1xf32>
    %cst_25 = arith.constant 1.562500e-02 : f32
    %56 = vector.broadcast %cst_25 : f32 to vector<8x1xf32>
    %57 = arith.mulf %52, %56 : vector<8x1xf32>
    %cst_26 = arith.constant 1.562500e-02 : f32
    %58 = vector.broadcast %cst_26 : f32 to vector<8x1xf32>
    %59 = arith.mulf %55, %58 : vector<8x1xf32>
    %60 = arith.mulf %57, %57 : vector<8x1xf32>
    %61 = arith.subf %59, %60 : vector<8x1xf32>
    %cst_27 = arith.constant 0.000000e+00 : f32
    %62 = vector.broadcast %cst_27 : f32 to vector<8x1xf32>
    %63 = arith.maximumf %61, %62 : vector<8x1xf32>
    %64 = vector.broadcast %57 : vector<8x1xf32> to vector<8x128xf32>
    %65 = arith.subf %50, %64 : vector<8x128xf32>
    %cst_28 = arith.constant 9.99999974E-6 : f32
    %66 = vector.broadcast %cst_28 : f32 to vector<8x1xf32>
    %67 = arith.addf %63, %66 : vector<8x1xf32>
    %68 = math.rsqrt %67 : vector<8x1xf32>
    %69 = vector.broadcast %68 : vector<8x1xf32> to vector<8x128xf32>
    %70 = arith.mulf %65, %69 : vector<8x128xf32>
    %c1 = arith.constant 1 : index
    %c0_29 = arith.constant 0 : index
    %71 = vector.load %arg5[%c1, %c0_29] : memref<3x128xf32, #tpu.memory_space<vmem>>, vector<1x128xf32>
    %72 = vector.broadcast %71 : vector<1x128xf32> to vector<8x128xf32>
    %73 = arith.mulf %70, %72 : vector<8x128xf32>
    %c2 = arith.constant 2 : index
    %c0_30 = arith.constant 0 : index
    %74 = vector.load %arg5[%c2, %c0_30] : memref<3x128xf32, #tpu.memory_space<vmem>>, vector<1x128xf32>
    %75 = vector.broadcast %74 : vector<1x128xf32> to vector<8x128xf32>
    %76 = arith.addf %73, %75 : vector<8x128xf32>
    %c0_31 = arith.constant 0 : index
    %c0_32 = arith.constant 0 : index
    %77 = vector.load %arg6[%c0_31, %c0_32] : memref<8x128xf32, #tpu.memory_space<vmem>>, vector<8x128xf32>
    tpu.vector_store %arg6[%c0_31, %c0_32], %76 {strides = array<i32>} : memref<8x128xf32, #tpu.memory_space<vmem>>, vector<8x128xf32>,
    return
  }
  func.func @transform_0(%arg0: i32) -> (i32, i32) {
    %c0_i32 = arith.constant 0 : i32
    %c0_i32_0 = arith.constant 0 : i32
    return %arg0, %c0_i32 : i32, i32
  }
  func.func @transform_1(%arg0: i32) -> (i32, i32) {
    %c0_i32 = arith.constant 0 : i32
    %c0_i32_0 = arith.constant 0 : i32
    %c0_i32_1 = arith.constant 0 : i32
    return %c0_i32, %c0_i32_0 : i32, i32
  }
  func.func @transform_2(%arg0: i32) -> (i32, i32) {
    %c0_i32 = arith.constant 0 : i32
    %c0_i32_0 = arith.constant 0 : i32
    %c0_i32_1 = arith.constant 0 : i32
    return %c0_i32, %c0_i32_0 : i32, i32
  }
  func.func @transform_3(%arg0: i32) -> (i32, i32) {
    %c0_i32 = arith.constant 0 : i32
    %c0_i32_0 = arith.constant 0 : i32
    %c0_i32_1 = arith.constant 0 : i32
    return %c0_i32, %c0_i32_0 : i32, i32
  }
  func.func @transform_4(%arg0: i32) -> (i32, i32) {
    %c0_i32 = arith.constant 0 : i32
    %c0_i32_0 = arith.constant 0 : i32
    %c0_i32_1 = arith.constant 0 : i32
    return %c0_i32, %c0_i32_0 : i32, i32
  }
  func.func @transform_5(%arg0: i32) -> (i32, i32) {
    %c0_i32 = arith.constant 0 : i32
    %c0_i32_0 = arith.constant 0 : i32
    return %arg0, %c0_i32 : i32, i32
  }
}

</mosaic_0001>

<llo_original>
// kernel: mlp_base_forward.1
$region0: #{mlp_base_forward.1}
  #allocation0 [shape = 'u32[]', space=smem, size = 0x4, offset = 0x4, fixed_abs, tag = 'smem constant byte address 0x4 - core index']
  #allocation1 [shape = 'u32[144,128]{1,0:T(1,128)}', space=vmem, size = 0x12000, scoped, tag = 'internal scratch']
  %s0 = inlined_call_operand.vmem [shape: f32[8,32], index: 0, kind: input, shape index: {}]
  %s1 = inlined_call_operand.vmem [shape: f32[32,128], index: 1, kind: input, shape index: {}]
  %s2 = inlined_call_operand.vmem [shape: f32[3,128], index: 2, kind: input, shape index: {}]
  %s3 = inlined_call_operand.vmem [shape: f32[128,128], index: 3, kind: input, shape index: {}]
  %s4 = inlined_call_operand.vmem [shape: f32[3,128], index: 4, kind: input, shape index: {}]
  %s5 = inlined_call_operand.hbm [shape: f32[8,128], index: 5, kind: output, shape index: {}]
  %s6 = sld [smem:[#allocation0]]
  $region30: #{mlp_base_forward.1} parent=0
    _
  %s8 = ssub.s32 1, %s6
  %s9 = scalar_select 0, %s8, %s6
  $region1: #{mlp_base_forward.1} parent=0
    #allocation2 [shape = 'u8[4096]{0}', space=vmem, size = 0x1000, scoped, tag = 'output window, operand 0, single buffered']
    #allocation3 [shape = 's32[1]{0}', space=sflag, size = 0x4, scoped, tag = 'scoped memory for mlp_base_forward.1']
    %10 = vsyncpa [#allocation3], 0
    // Predicated region
    $region2: #{mlp_base_forward.1} parent=1 // pred_check
      _
    $region3: #{mlp_base_forward.1} parent=1 // pred_check_branch
      %12 = sbr.rel (0) target = $region5
    $region4: #{mlp_base_forward.1} parent=1 // pred_region
      _
    $region5: #{mlp_base_forward.1} parent=1 // pred_fallthru
      _
    // Predicated region
    $region6: #{mlp_base_forward.1} parent=1 // pred_check
      _
    $region7: #{mlp_base_forward.1} parent=1 // pred_check_branch
      %14 = sbr.rel (0) target = $region9
    $region8: #{mlp_base_forward.1} parent=1 // pred_region
      _
    $region9: #{mlp_base_forward.1} parent=1 // pred_fallthru
      _
    // Predicated region
    $region10: #{mlp_base_forward.1} parent=1 // pred_check
      _
    $region11: #{mlp_base_forward.1} parent=1 // pred_check_branch
      %16 = sbr.rel (0) target = $region13
    $region12: #{mlp_base_forward.1} parent=1 // pred_region
      _
    $region13: #{mlp_base_forward.1} parent=1 // pred_fallthru
      _
    // Predicated region
    $region14: #{mlp_base_forward.1} parent=1 // pred_check
      _
    $region15: #{mlp_base_forward.1} parent=1 // pred_check_branch
      %18 = sbr.rel (0) target = $region17
    $region16: #{mlp_base_forward.1} parent=1 // pred_region
      _
    $region17: #{mlp_base_forward.1} parent=1 // pred_fallthru
      _
    // Predicated region
    $region18: #{mlp_base_forward.1} parent=1 // pred_check
      _
    $region19: #{mlp_base_forward.1} parent=1 // pred_check_branch
      %20 = sbr.rel (0) target = $region21
    $region20: #{mlp_base_forward.1} parent=1 // pred_region
      _
    $region21: #{mlp_base_forward.1} parent=1 // pred_fallthru
      _
    %v21 = vld [vmem:[%s0] sm:$0xff]
    %vm22 = vcmask 261120
    %v23 = vsel %vm22, %v21, 0.0
    %24 = vadd.xlane.f32.xlu0 %v23
    %v25 = vpop.xlane.xlu0 %24
    %v26 = vrcp.pop 32.0
    %v27 = vmul.f32 %v25, %v26
    %v28 = vsub.f32 %v21, %v27
    %v29 = vmul.f32 %v28, %v28
    %v30 = vsel %vm22, %v29, 0.0
    %31 = vadd.xlane.f32.xlu0 %v30
    %v32 = vpop.xlane.xlu0 %31
    %v33 = vmul.f32 %v32, %v26
    %v34 = vadd.f32 %v33, 1e-05
    %v35 = vrsqrt.pop %v34
    %v36 = vmul.f32 %v28, %v35
    %v37 = vld [vmem:[%s1] sm:$0xff]
    %v38 = vld [vmem:[%s1 + $0x8] sm:$0xff]
    %v39 = vld [vmem:[%s1 + $0x10] sm:$0xff]
    %v40 = vld [vmem:[%s1 + $0x18] sm:$0xff]
    %v41 = vld [vmem:[%s2] sm:$0x1]
    %v42 = vlaneseq
    %v43 = vshrl.u32 %v42, 7
    %v44 = vsub.s32 0, %v43
    %v45 = vrot.slane %v41, %v44
    %v47 = vsel %vm22, %v36, 0
    %49 = vmatprep.subr.mxu0 0.0
    %50 = vmatpush1.msra.mxu0 %v37
    %51 = vmatprep.subr.mxu0 0.0
    %52 = vmatpush1.msra.mxu0 %v38
    %53 = vmatprep.subr.mxu0 0.0
    %54 = vmatpush1.msra.mxu0 %v39
    %55 = vmatprep.subr.mxu0 0.0
    %56 = vmatpush1.msra.mxu0 %v40
    %57 = vmatprep.subr.mxu0 0.0
    %58 = vmatpush1.msra.mxu0 0.0
    %59 = vmatprep.subr.mxu0 0.0
    %60 = vmatpush1.msra.mxu0 0.0
    %61 = vmatprep.subr.mxu0 0.0
    %62 = vmatpush1.msra.mxu0 0.0
    %63 = vmatprep.subr.mxu0 0.0
    %64 = vmatpush1.msra.mxu0 0.0
    %65 = vmatprep.subr.mxu0 0.0
    %66 = vmatpush1.msra.mxu0 0.0
    %67 = vmatprep.subr.mxu0 0.0
    %68 = vmatpush1.msra.mxu0 0.0
    %69 = vmatprep.subr.mxu0 0.0
    %70 = vmatpush1.msra.mxu0 0.0
    %71 = vmatprep.subr.mxu0 0.0
    %72 = vmatpush1.msra.mxu0 0.0
    %73 = vmatprep.subr.mxu0 0.0
    %74 = vmatpush1.msra.mxu0 0.0
    %75 = vmatprep.subr.mxu0 0.0
    %76 = vmatpush1.msra.mxu0 0.0
    %77 = vmatprep.subr.mxu0 0.0
    %78 = vmatpush1.msra.mxu0 0.0
    %79 = vmatprep.subr.mxu0 0.0
    %80 = vmatpush1.msra.mxu0 0.0
    %81 = vmatprep.subr.mxu0 0.0
    %82 = vmatpush1.msra.mxu0 0.0
    %83 = vmatprep.subr.mxu0 0.0
    %84 = vmatpush1.msra.mxu0 0.0
    %85 = vmatprep.subr.mxu0 0.0
    %86 = vmatpush1.msra.mxu0 0.0
    %87 = vmatprep.subr.mxu0 0.0
    %88 = vmatpush1.msra.mxu0 0.0
    %89 = vmatprep.subr.mxu0 0.0
    %90 = vmatpush1.msra.mxu0 0.0
    %91 = vmatprep.subr.mxu0 0.0
    %92 = vmatpush1.msra.mxu0 0.0
    %93 = vmatprep.subr.mxu0 0.0
    %94 = vmatpush1.msra.mxu0 0.0
    %95 = vmatprep.subr.mxu0 0.0
    %96 = vmatpush1.msra.mxu0 0.0
    %97 = vmatprep.subr.mxu0 0.0
    %98 = vmatpush1.msra.mxu0 0.0
    %99 = vmatprep.subr.mxu0 0.0
    %100 = vmatpush1.msra.mxu0 0.0
    %101 = vmatprep.subr.mxu0 0.0
    %102 = vmatpush1.msra.mxu0 0.0
    %103 = vmatprep.subr.mxu0 0.0
    %104 = vmatpush1.msra.mxu0 0.0
    %105 = vmatprep.subr.mxu0 0.0
    %106 = vmatpush1.msra.mxu0 0.0
    %107 = vmatprep.subr.mxu0 0.0
    %108 = vmatpush1.msra.mxu0 0.0
    %109 = vmatprep.subr.mxu0 0.0
    %110 = vmatpush1.msra.mxu0 0.0
    %111 = vmatprep.subr.mxu0 0.0
    %112 = vmatpush1.msra.mxu0 0.0
    %113 = vmatprep.mubr.f32.mxu0 0.0
    %114 = vmatmul.mubr.f32.gmra.mrb[0].mxu0 %v47
    %v115 = vpop.f32.mrb[0].mxu0
    %v116 = vadd.f32 %v45, %v115
    %v117 = vpop.f32.mrb[0].mxu0
    %118 = vdwg.mxu0
    %v119 = vmax.f32 %v116, 0.0
    %120 = vadd.xlane.f32.xlu0 %v119
    %v121 = vpop.xlane.xlu0 %120
    %v122 = vmul.f32 %v119, %v119
    %123 = vadd.xlane.f32.xlu0 %v122
    %v124 = vpop.xlane.xlu0 %123
    %v125 = vmul.f32 %v121, 0.015625
    %v126 = vmul.f32 %v124, 0.015625
    %v127 = vmul.f32 %v125, %v125
    %v128 = vsub.f32 %v126, %v127
    %v129 = vmax.f32 %v128, 0.0
    %v130 = vsub.f32 %v119, %v125
    %v131 = vadd.f32 %v129, 1e-05
    %v132 = vrsqrt.pop %v131
    %v133 = vmul.f32 %v130, %v132
    %v134 = vld [vmem:[%s3] sm:$0xff]
    %v135 = vld [vmem:[%s3 + $0x8] sm:$0xff]
    %v136 = vld [vmem:[%s3 + $0x10] sm:$0xff]
    %v137 = vld [vmem:[%s3 + $0x18] sm:$0xff]
    %v138 = vld [vmem:[%s3 + $0x20] sm:$0xff]
    %v139 = vld [vmem:[%s3 + $0x28] sm:$0xff]
    %v140 = vld [vmem:[%s3 + $0x30] sm:$0xff]
    %v141 = vld [vmem:[%s3 + $0x38] sm:$0xff]
    %v142 = vld [vmem:[%s3 + $0x40] sm:$0xff]
    %v143 = vld [vmem:[%s3 + $0x48] sm:$0xff]
    %v144 = vld [vmem:[%s3 + $0x50] sm:$0xff]
    %v145 = vld [vmem:[%s3 + $0x58] sm:$0xff]
    %v146 = vld [vmem:[%s3 + $0x60] sm:$0xff]
    %v147 = vld [vmem:[%s3 + $0x68] sm:$0xff]
    %v148 = vld [vmem:[%s3 + $0x70] sm:$0xff]
    %v149 = vld [vmem:[%s3 + $0x78] sm:$0xff]
    %v150 = vld [vmem:[%s4] sm:$0x1]
    %v151 = vlaneseq
    %v152 = vshrl.u32 %v151, 7
    %v153 = vsub.s32 0, %v152
    %v154 = vrot.slane %v150, %v153
    %155 = vmatprep.subr.mxu0 0.0
    %156 = vmatpush1.msra.mxu0 %v134
    %157 = vmatprep.subr.mxu0 0.0
    %158 = vmatpush1.msra.mxu0 %v135
    %159 = vmatprep.subr.mxu0 0.0
    %160 = vmatpush1.msra.mxu0 %v136
    %161 = vmatprep.subr.mxu0 0.0
    %162 = vmatpush1.msra.mxu0 %v137
    %163 = vmatprep.subr.mxu0 0.0
    %164 = vmatpush1.msra.mxu0 %v138
    %165 = vmatprep.subr.mxu0 0.0
    %166 = vmatpush1.msra.mxu0 %v139
    %167 = vmatprep.subr.mxu0 0.0
    %168 = vmatpush1.msra.mxu0 %v140
    %169 = vmatprep.subr.mxu0 0.0
    %170 = vmatpush1.msra.mxu0 %v141
    %171 = vmatprep.subr.mxu0 0.0
    %172 = vmatpush1.msra.mxu0 %v142
    %173 = vmatprep.subr.mxu0 0.0
    %174 = vmatpush1.msra.mxu0 %v143
    %175 = vmatprep.subr.mxu0 0.0
    %176 = vmatpush1.msra.mxu0 %v144
    %177 = vmatprep.subr.mxu0 0.0
    %178 = vmatpush1.msra.mxu0 %v145
    %179 = vmatprep.subr.mxu0 0.0
    %180 = vmatpush1.msra.mxu0 %v146
    %181 = vmatprep.subr.mxu0 0.0
    %182 = vmatpush1.msra.mxu0 %v147
    %183 = vmatprep.subr.mxu0 0.0
    %184 = vmatpush1.msra.mxu0 %v148
    %185 = vmatprep.subr.mxu0 0.0
    %186 = vmatpush1.msra.mxu0 %v149
    %187 = vmatprep.subr.mxu0 0.0
    %188 = vmatpush1.msra.mxu0 0.0
    %189 = vmatprep.subr.mxu0 0.0
    %190 = vmatpush1.msra.mxu0 0.0
    %191 = vmatprep.subr.mxu0 0.0
    %192 = vmatpush1.msra.mxu0 0.0
    %193 = vmatprep.subr.mxu0 0.0
    %194 = vmatpush1.msra.mxu0 0.0
    %195 = vmatprep.subr.mxu0 0.0
    %196 = vmatpush1.msra.mxu0 0.0
    %197 = vmatprep.subr.mxu0 0.0
    %198 = vmatpush1.msra.mxu0 0.0
    %199 = vmatprep.subr.mxu0 0.0
    %200 = vmatpush1.msra.mxu0 0.0
    %201 = vmatprep.subr.mxu0 0.0
    %202 = vmatpush1.msra.mxu0 0.0
    %203 = vmatprep.subr.mxu0 0.0
    %204 = vmatpush1.msra.mxu0 0.0
    %205 = vmatprep.subr.mxu0 0.0
    %206 = vmatpush1.msra.mxu0 0.0
    %207 = vmatprep.subr.mxu0 0.0
    %208 = vmatpush1.msra.mxu0 0.0
    %209 = vmatprep.subr.mxu0 0.0
    %210 = vmatpush1.msra.mxu0 0.0
    %211 = vmatprep.subr.mxu0 0.0
    %212 = vmatpush1.msra.mxu0 0.0
    %213 = vmatprep.subr.mxu0 0.0
    %214 = vmatpush1.msra.mxu0 0.0
    %215 = vmatprep.subr.mxu0 0.0
    %216 = vmatpush1.msra.mxu0 0.0
    %217 = vmatprep.subr.mxu0 0.0
    %218 = vmatpush1.msra.mxu0 0.0
    %219 = vmatprep.mubr.f32.mxu0 0.0
    %220 = vmatmul.mubr.f32.gmra.mrb[0].mxu0 %v133
    %v221 = vpop.f32.mrb[0].mxu0
    %v222 = vadd.f32 %v154, %v221
    %v223 = vpop.f32.mrb[0].mxu0
    %224 = vdwg.mxu0
    %v225 = vmax.f32 %v222, 0.0
    %226 = vadd.xlane.f32.xlu0 %v225
    %v227 = vpop.xlane.xlu0 %226
    %v228 = vmul.f32 %v225, %v225
    %229 = vadd.xlane.f32.xlu0 %v228
    %v230 = vpop.xlane.xlu0 %229
    %v231 = vmul.f32 %v227, 0.015625
    %v232 = vmul.f32 %v230, 0.015625
    %v233 = vmul.f32 %v231, %v231
    %v234 = vsub.f32 %v232, %v233
    %v235 = vmax.f32 %v234, 0.0
    %v236 = vsub.f32 %v225, %v231
    %v237 = vadd.f32 %v235, 1e-05
    %v238 = vrsqrt.pop %v237
    %v239 = vmul.f32 %v236, %v238
    %v240 = vld [vmem:[%s4 + $0x1] sm:$0x1]
    %v241 = vlaneseq
    %v242 = vshrl.u32 %v241, 7
    %v243 = vsub.s32 0, %v242
    %v244 = vrot.slane %v240, %v243
    %v245 = vmul.f32 %v239, %v244
    %v246 = vld [vmem:[%s4 + $0x2] sm:$0x1]
    %v247 = vlaneseq
    %v248 = vshrl.u32 %v247, 7
    %v249 = vsub.s32 0, %v248
    %v250 = vrot.slane %v246, %v249
    %v251 = vadd.f32 %v245, %v250
    %252 = vst [vmem:[#allocation2] sm:$0xff] %v251
    // Predicated region
    $region22: #{mlp_base_forward.1} parent=1 // pred_check
      _
    $region23: #{mlp_base_forward.1} parent=1 // pred_check_branch
      %254 = sbr.rel (0) target = $region25
    $region24: #{mlp_base_forward.1} parent=1 // pred_region
      %s256 = ssub.s32 128, 128
      %257 = vsyncadd [#allocation3], %s256
      %s259 = sshll.u32 [#allocation2], 4
      %s260 = int_to_ptr.vmem [resolvable:$true] %s259
      %262 = dma.vmem_to_hbm [thread:$0]  %s260, 128, %s5, [#allocation3]
    $region25: #{mlp_base_forward.1} parent=1 // pred_fallthru
      _
    // Predicated region
    $region26: #{mlp_base_forward.1} parent=1 // pred_check
      _
    $region27: #{mlp_base_forward.1} parent=1 // pred_check_branch
      %264 = sbr.rel (0) target = $region29
    $region28: #{mlp_base_forward.1} parent=1 // pred_region
      %265 = dma.done [#allocation3], 128
    $region29: #{mlp_base_forward.1} parent=1 // pred_fallthru
      _
    %266 = vsyncpa [#allocation3], 1

</llo_original>
